<compile_context>
chip_gen: v5e
topology: v5e:2x2
jax: 0.10.0
libtpu: 0.0.40
codegen_flags: <defaults>
</compile_context>

<pallas_src>
from functools import partial

import numpy as np
import jax
import jax.numpy as jnp
from jax.experimental import pallas as pl
from jax.experimental.pallas import tpu as pltpu


# --------------------- derived constant operators (exact, host-side, f64) ---------------------

def avg_pool_matrix(size: int, scale: int) -> np.ndarray:
    """(size//scale, size) matrix M s.t. M @ v = avg_pool1d(v, scale, stride=scale)."""
    out = size // scale
    m = np.zeros((out, size), dtype=np.float64)
    m[np.arange(size) // scale, np.arange(size)] = 1.0 / scale
    return m


def bilinear_matrix(in_size: int, out_size: int) -> np.ndarray:
    """(out_size, in_size) 1-D bilinear interpolation matrix,
    matching F.interpolate(mode='bilinear', align_corners=False)."""
    scale = in_size / out_size
    dst = np.arange(out_size, dtype=np.float64)
    src = np.maximum((dst + 0.5) * scale - 0.5, 0.0)   # PyTorch clamps negatives to 0
    i0 = np.minimum(np.floor(src).astype(np.int64), in_size - 1)
    i1 = np.minimum(i0 + 1, in_size - 1)
    frac = src - i0
    m = np.zeros((out_size, in_size), dtype=np.float64)
    np.add.at(m, (np.arange(out_size), i0), 1.0 - frac)
    np.add.at(m, (np.arange(out_size), i1), frac)
    return m


# ----------------------------------- Pallas kernel -----------------------------------

def naive_recon_kernel(x_ref, w_ref, e_ref, ets_ref, comp_ref, recon_ref, *, comp_pad):
    # x_ref:   (NC, HW)            input slab, original dtype (cast once here)
    # w_ref:   (HW, comp_pad+OO)   bf16 fused operator: [kron(ph,pw)^T zero-padded | kron(uh@ph, uw@pw)^T]
    # e_ref:   (C, NC)             one-hot "rows of this channel" (f32)
    # ets_ref: (NC, C)             e^T / (N*OO)  (broadcast-back + mean scaling folded in)
    x = x_ref[...].astype(jnp.bfloat16)

    # One fused MXU pass; comp_pad and OO are multiples of 128, so the lane slices
    # below are tile-aligned (no relayout copies).
    y = jnp.dot(x, w_ref[...], preferred_element_type=jnp.float32)
    comp_ref[...] = y[:, :comp_pad]                           # lane-dense 128-wide store
    g = y[:, comp_pad:]                                       # (NC, OO) f32

    e = e_ref[...]
    ets = ets_ref[...]

    # Per-channel normalization over (batch, H, W): lane reductions FIRST, then the
    # channel combine on (NC, 1) vectors (both ops are linear, so this is exact).
    row_sum = jnp.sum(g, axis=-1, keepdims=True)                               # (NC, 1)
    mean = jnp.dot(ets, jnp.dot(e, row_sum, preferred_element_type=jnp.float32),
                   preferred_element_type=jnp.float32)                          # (NC, 1)
    d = g - mean
    row_ss = jnp.sum(d * d, axis=-1, keepdims=True)                             # (NC, 1)
    var = jnp.dot(ets, jnp.dot(e, row_ss, preferred_element_type=jnp.float32),
                  preferred_element_type=jnp.float32)                           # (NC, 1)
    # No epsilon: matches the PyTorch reference (divides by sqrt(var)); a constant
    # channel (var == 0) gives inf/NaN exactly like the reference.
    recon_ref[...] = (d * jax.lax.rsqrt(var)).astype(recon_ref.dtype)           # 1024-lane store


# ------------------------------------- wrapper -------------------------------------

def naive_recon(x, scale: int, out_size: int = 32):
    N, C, H, W = x.shape
    assert H % scale == 0 and W % scale == 0
    Hc, Wc = H // scale, W // scale
    NC, HW, OO = N * C, H * W, out_size * out_size
    comp_pad = ((Hc * Wc + 127) // 128) * 128          # lane-dense comp width (>=128)

    # Exact operators in f64, cast once (module has no learnable parameters).
    ph = avg_pool_matrix(H, scale)                     # (Hc, H)
    pw = avg_pool_matrix(W, scale)                     # (Wc, W)
    uh = bilinear_matrix(Hc, out_size)                 # (out, Hc)
    uw = bilinear_matrix(Wc, out_size)                 # (out, Wc)

    PT = np.kron(ph, pw).T                             # (HW, Hc*Wc)   pool operator
    AT = np.kron(uh @ ph, uw @ pw).T                   # (HW, OO)      folded pool+upsample
    PT_pad = np.zeros((HW, comp_pad), dtype=np.float64)
    PT_pad[:, :Hc * Wc] = PT
    W_all = jnp.asarray(np.concatenate([PT_pad, AT], axis=1), dtype=jnp.bfloat16)  # (HW, comp_pad+OO)

    # Channel-combine operators.  Row i of the (NC, HW) slab has channel i % C
    # (NCHW flattening keeps C as the fast axis of NC).
    idx = np.arange(NC)
    cid = np.arange(C)
    E = jnp.asarray(idx[None, :] % C == cid[:, None], dtype=jnp.float32)            # (C, NC)
    ETs = jnp.asarray((idx[:, None] % C == cid[None, :]) / float(N * OO),
                      dtype=jnp.float32)                                            # (NC, C)

    x_flat = x.reshape(NC, HW)                         # free reshape of contiguous NCHW

    flops = int(2 * NC * HW * (comp_pad + OO)          # fused GEMM
                + 8 * NC * C                           # tiny channel combines
                + 6 * NC * OO)                         # normalize elementwise
    bytes_accessed = int(x_flat.size * x_flat.dtype.itemsize
                         + W_all.size * 2
                         + (E.size + ETs.size) * 4
                         + 4 * NC * (comp_pad + OO))

    vmem = lambda: pl.BlockSpec(memory_space=pltpu.MemorySpace.VMEM)
    comp_flat, recon_flat = pl.pallas_call(
        partial(naive_recon_kernel, comp_pad=comp_pad),
        out_shape=(
            jax.ShapeDtypeStruct((NC, comp_pad), jnp.float32),
            jax.ShapeDtypeStruct((NC, OO), jnp.float32),
        ),
        in_specs=[vmem() for _ in range(4)],
        out_specs=(vmem(), vmem()),
        cost_estimate=pl.CostEstimate(
            flops=flops, transcendentals=NC, bytes_accessed=bytes_accessed),
    )(x_flat, W_all, E, ETs)

    comp = comp_flat[:, :Hc * Wc].reshape(N, C, Hc, Wc)
    recon = recon_flat.reshape(N, C, out_size, out_size)
    return comp, recon


# --------------------------------------- main ---------------------------------------

if __name__ == "__main__":
    key = jax.random.PRNGKey(0)
    N, C, H, W = 2, 4, 16, 16
    scale = 2
    x = jax.random.normal(key, (N, C, H, W), dtype=jnp.float32)

    comp, recon = naive_recon(x, scale)
    jax.block_until_ready((comp, recon))

    # --- sanity checks vs. a plain-JAX f32 reference ---
    # (bf16 MXU operands with f32 accumulation => tolerances loosened per review.)
    comp_ref = x.reshape(N, C, H // scale, scale, W // scale, scale).mean(axis=(3, 5))
    assert comp.shape == (N, C, H // scale, W // scale)
    assert float(jnp.max(jnp.abs(comp - comp_ref))) < 2e-2, "avg_pool mismatch"

    uh = jnp.asarray(bilinear_matrix(H // scale, 32), dtype=jnp.float32)
    uw = jnp.asarray(bilinear_matrix(W // scale, 32), dtype=jnp.float32)
    grow_ref = jnp.einsum('hi,ncij,wj->nchw', uh, comp_ref, uw)
    mean_ref = grow_ref.mean(axis=(0, 2, 3), keepdims=True)
    std_ref = jnp.sqrt(((grow_ref - mean_ref) ** 2).mean(axis=(0, 2, 3), keepdims=True))
    recon_ref = (grow_ref - mean_ref) / std_ref
    assert recon.shape == (N, C, 32, 32)
    assert float(jnp.max(jnp.abs(recon - recon_ref))) < 8e-2, "reconstruction mismatch"

    print("KERNEL_OK")
</pallas_src>

<mosaic_0001>
module attributes {stable_mosaic.version = 11 : i64} {
  func.func @naive_recon_kernel(%arg0: memref<8x256xf32, #tpu.memory_space<vmem>>, %arg1: memref<256x1152xbf16, #tpu.memory_space<vmem>>, %arg2: memref<4x8xf32, #tpu.memory_space<vmem>>, %arg3: memref<8x4xf32, #tpu.memory_space<vmem>>, %arg4: memref<8x128xf32, #tpu.memory_space<vmem>>, %arg5: memref<8x1024xf32, #tpu.memory_space<vmem>>) attributes {dimension_semantics = [], scalar_prefetch = 0 : i64, scratch_operands = 0 : i64, tpu.core_type = #tpu.core_type<tc>} {
    %c0 = arith.constant 0 : index
    %c0_0 = arith.constant 0 : index
    %0 = vector.load %arg0[%c0, %c0_0] : memref<8x256xf32, #tpu.memory_space<vmem>>, vector<8x256xf32>
    %1 = arith.truncf %0 : vector<8x256xf32> to vector<8x256xbf16>
    %c0_1 = arith.constant 0 : index
    %c0_2 = arith.constant 0 : index
    %2 = vector.load %arg1[%c0_1, %c0_2] : memref<256x1152xbf16, #tpu.memory_space<vmem>>, vector<256x1152xbf16>
    %cst = arith.constant dense<0.000000e+00> : vector<8x1152xf32>
    %3 = tpu.matmul %1, %2, %cst {dimension_numbers = #tpu.dot_dimension_numbers<[1], [0], [0], [1], [0, 0, 1, 1], [], []>} : vector<8x256xbf16>, vector<256x1152xbf16>, vector<8x1152xf32> -> vector<8x1152xf32>
    %4 = vector.extract_strided_slice %3 {offsets = [0, 0], sizes = [8, 128], strides = [1, 1]} : vector<8x1152xf32> to vector<8x128xf32>
    %c0_3 = arith.constant 0 : index
    %c0_4 = arith.constant 0 : index
    %5 = vector.load %arg4[%c0_3, %c0_4] : memref<8x128xf32, #tpu.memory_space<vmem>>, vector<8x128xf32>
    tpu.vector_store %arg4[%c0_3, %c0_4], %4 {strides = array<i32>} : memref<8x128xf32, #tpu.memory_space<vmem>>, vector<8x128xf32>,
    %6 = vector.extract_strided_slice %3 {offsets = [0, 128], sizes = [8, 1024], strides = [1, 1]} : vector<8x1152xf32> to vector<8x1024xf32>
    %c0_5 = arith.constant 0 : index
    %c0_6 = arith.constant 0 : index
    %7 = vector.load %arg2[%c0_5, %c0_6] : memref<4x8xf32, #tpu.memory_space<vmem>>, vector<4x8xf32>
    %c0_7 = arith.constant 0 : index
    %c0_8 = arith.constant 0 : index
    %8 = vector.load %arg3[%c0_7, %c0_8] : memref<8x4xf32, #tpu.memory_space<vmem>>, vector<8x4xf32>
    %cst_9 = arith.constant dense<0.000000e+00> : vector<8xf32>
    %9 = vector.multi_reduction <add>, %6, %cst_9 [1] : vector<8x1024xf32> to vector<8xf32>
    %10 = vector.shape_cast %9 : vector<8xf32> to vector<8x1xf32>
    %cst_10 = arith.constant dense<0.000000e+00> : vector<4x1xf32>
    %11 = tpu.matmul %7, %10, %cst_10 {dimension_numbers = #tpu.dot_dimension_numbers<[1], [0], [0], [1], [0, 0, 1, 1], [], []>} : vector<4x8xf32>, vector<8x1xf32>, vector<4x1xf32> -> vector<4x1xf32>
    %cst_11 = arith.constant dense<0.000000e+00> : vector<8x1xf32>
    %12 = tpu.matmul %8, %11, %cst_11 {dimension_numbers = #tpu.dot_dimension_numbers<[1], [0], [0], [1], [0, 0, 1, 1], [], []>} : vector<8x4xf32>, vector<4x1xf32>, vector<8x1xf32> -> vector<8x1xf32>
    %13 = vector.broadcast %12 : vector<8x1xf32> to vector<8x1024xf32>
    %14 = arith.subf %6, %13 : vector<8x1024xf32>
    %15 = arith.mulf %14, %14 : vector<8x1024xf32>
    %cst_12 = arith.constant dense<0.000000e+00> : vector<8xf32>
    %16 = vector.multi_reduction <add>, %15, %cst_12 [1] : vector<8x1024xf32> to vector<8xf32>
    %17 = vector.shape_cast %16 : vector<8xf32> to vector<8x1xf32>
    %cst_13 = arith.constant dense<0.000000e+00> : vector<4x1xf32>
    %18 = tpu.matmul %7, %17, %cst_13 {dimension_numbers = #tpu.dot_dimension_numbers<[1], [0], [0], [1], [0, 0, 1, 1], [], []>} : vector<4x8xf32>, vector<8x1xf32>, vector<4x1xf32> -> vector<4x1xf32>
    %cst_14 = arith.constant dense<0.000000e+00> : vector<8x1xf32>
    %19 = tpu.matmul %8, %18, %cst_14 {dimension_numbers = #tpu.dot_dimension_numbers<[1], [0], [0], [1], [0, 0, 1, 1], [], []>} : vector<8x4xf32>, vector<4x1xf32>, vector<8x1xf32> -> vector<8x1xf32>
    %20 = math.rsqrt %19 : vector<8x1xf32>
    %21 = vector.broadcast %20 : vector<8x1xf32> to vector<8x1024xf32>
    %22 = arith.mulf %14, %21 : vector<8x1024xf32>
    %c0_15 = arith.constant 0 : index
    %c0_16 = arith.constant 0 : index
    %23 = vector.load %arg5[%c0_15, %c0_16] : memref<8x1024xf32, #tpu.memory_space<vmem>>, vector<8x1024xf32>
    tpu.vector_store %arg5[%c0_15, %c0_16], %22 {strides = array<i32>} : memref<8x1024xf32, #tpu.memory_space<vmem>>, vector<8x1024xf32>,
    return
  }
}

</mosaic_0001>

<llo_original>
// kernel: tpu_custom_call.1
$region0: #{tpu_custom_call.1}
  #allocation0 [shape = 'u32[]', space=smem, size = 0x4, offset = 0x4, fixed_abs, tag = 'smem constant byte address 0x4 - core index']
  #allocation1 [shape = 'u32[72,128]{1,0:T(1,128)}', space=vmem, size = 0x9000, scoped, tag = 'internal scratch']
  %s0 = inlined_call_operand.hbm [shape: f32[8,256], index: 0, kind: input, shape index: {}]
  %s1 = inlined_call_operand.hbm [shape: bf16[256,1152], index: 1, kind: input, shape index: {}]
  %s2 = inlined_call_operand.vmem [shape: f32[4,8], index: 2, kind: input, shape index: {}]
  %s3 = inlined_call_operand.vmem [shape: f32[8,4], index: 3, kind: input, shape index: {}]
  %s4 = inlined_call_operand.hbm [shape: f32[8,128], index: 4, kind: output, shape index: {0}]
  %s5 = inlined_call_operand.hbm [shape: f32[8,1024], index: 5, kind: output, shape index: {1}]
  %6 = xla_tuple %s4, %s5
  %s7 = sld [smem:[#allocation0]]
  $region42: #{tpu_custom_call.1} parent=0
    _
  %s9 = ssub.s32 1, %s7
  %s10 = scalar_select 0, %s9, %s7
  $region1: #{tpu_custom_call.1} parent=0
    #allocation2 [shape = 'u8[8192]{0}', space=vmem, size = 0x2000, scoped, tag = 'input window, operand 0, single buffered']
    #allocation3 [shape = 's32[1]{0}', space=sflag, size = 0x4, scoped, tag = 'scoped memory for tpu_custom_call.1']
    #allocation4 [shape = 's32[1]{0}', space=sflag, size = 0x4, scoped, tag = 'scoped memory for tpu_custom_call.1']
    #allocation5 [shape = 'u8[589824]{0}', space=vmem, size = 0x90000, scoped, tag = 'input window, operand 1, single buffered']
    #allocation6 [shape = 's32[1]{0}', space=sflag, size = 0x4, scoped, tag = 'scoped memory for tpu_custom_call.1']
    #allocation7 [shape = 'u8[4096]{0}', space=vmem, size = 0x1000, scoped, tag = 'output window, operand 0, single buffered']
    #allocation8 [shape = 'u8[32768]{0}', space=vmem, size = 0x8000, scoped, tag = 'output window, operand 1, single buffered']
    #allocation9 [shape = 's32[1]{0}', space=sflag, size = 0x4, scoped, tag = 'scoped memory for tpu_custom_call.1']
    %11 = vsyncpa [#allocation3], 0
    %12 = vsyncpa [#allocation6], 0
    %13 = vsyncpa [#allocation4], 0
    %14 = vsyncpa [#allocation9], 0
    // Predicated region
    $region2: #{tpu_custom_call.1} parent=1 // pred_check
      _
    $region3: #{tpu_custom_call.1} parent=1 // pred_check_branch
      %16 = sbr.rel (0) target = $region5
    $region4: #{tpu_custom_call.1} parent=1 // pred_region
      %18 = vsyncadd [#allocation3], 0
      %s20 = sshll.u32 %s0, 4
      %s21 = int_to_ptr.hbm [resolvable:$true] %s20
      %s22 = sshll.u32 [#allocation2], 4
      %s23 = int_to_ptr.vmem [resolvable:$true] %s22
      %25 = dma.hbm_to_vmem [thread:$0]  %s21, 256, %s23, [#allocation3]
    $region5: #{tpu_custom_call.1} parent=1 // pred_fallthru
      _
    // Predicated region
    $region6: #{tpu_custom_call.1} parent=1 // pred_check
      _
    $region7: #{tpu_custom_call.1} parent=1 // pred_check_branch
      %27 = sbr.rel (0) target = $region9
    $region8: #{tpu_custom_call.1} parent=1 // pred_region
      %29 = vsyncadd [#allocation6], 0
      %s30 = sshll.u32 %s1, 4
      %s31 = int_to_ptr.hbm [resolvable:$true] %s30
      %s32 = sshll.u32 [#allocation5], 4
      %s33 = int_to_ptr.vmem [resolvable:$true] %s32
      %38 = dma.hbm_to_vmem [thread:$0]  %s31, 18432, %s33, [#allocation6], 576, 576, 36
    $region9: #{tpu_custom_call.1} parent=1 // pred_fallthru
      _
    // Predicated region
    $region10: #{tpu_custom_call.1} parent=1 // pred_check
      _
    $region11: #{tpu_custom_call.1} parent=1 // pred_check_branch
      %40 = sbr.rel (0) target = $region13
    $region12: #{tpu_custom_call.1} parent=1 // pred_region
      _
    $region13: #{tpu_custom_call.1} parent=1 // pred_fallthru
      _
    // Predicated region
    $region14: #{tpu_custom_call.1} parent=1 // pred_check
      _
    $region15: #{tpu_custom_call.1} parent=1 // pred_check_branch
      %42 = sbr.rel (0) target = $region17
    $region16: #{tpu_custom_call.1} parent=1 // pred_region
      _
    $region17: #{tpu_custom_call.1} parent=1 // pred_fallthru
      _
    // Predicated region
    $region18: #{tpu_custom_call.1} parent=1 // pred_check
      _
    $region19: #{tpu_custom_call.1} parent=1 // pred_check_branch
      %44 = sbr.rel (0) target = $region21
    $region20: #{tpu_custom_call.1} parent=1 // pred_region
      %46 = dma.done [#allocation3], 256
    $region21: #{tpu_custom_call.1} parent=1 // pred_fallthru
      _
    // Predicated region
    $region22: #{tpu_custom_call.1} parent=1 // pred_check
      _
    $region23: #{tpu_custom_call.1} parent=1 // pred_check_branch
      %48 = sbr.rel (0) target = $region25
    $region24: #{tpu_custom_call.1} parent=1 // pred_region
      %50 = dma.done [#allocation6], 18432
    $region25: #{tpu_custom_call.1} parent=1 // pred_fallthru
      _
    %v51 = vld [vmem:[#allocation2] sm:$0xff]
    %v52 = vld [vmem:[#allocation2 + $0x8] sm:$0xff]
    %v53 = vpack.c.bf16 %v51, %v51
    %v54 = vpack.c.bf16 %v52, %v52
    %v55 = vld [vmem:[#allocation5] sm:$0xff]
    %v56 = vld [vmem:[#allocation5 + $0x8] sm:$0xff]
    %v57 = vld [vmem:[#allocation5 + $0x10] sm:$0xff]
    %v58 = vld [vmem:[#allocation5 + $0x18] sm:$0xff]
    %v59 = vld [vmem:[#allocation5 + $0x20] sm:$0xf]
    %v60 = vld [vmem:[#allocation5 + $0x24] sm:$0xff]
    %v61 = vld [vmem:[#allocation5 + $0x2c] sm:$0xff]
    %v62 = vld [vmem:[#allocation5 + $0x34] sm:$0xff]
    %v63 = vld [vmem:[#allocation5 + $0x3c] sm:$0xff]
    %v64 = vld [vmem:[#allocation5 + $0x44] sm:$0xf]
    %v65 = vld [vmem:[#allocation5 + $0x48] sm:$0xff]
    %v66 = vld [vmem:[#allocation5 + $0x50] sm:$0xff]
    %v67 = vld [vmem:[#allocation5 + $0x58] sm:$0xff]
    %v68 = vld [vmem:[#allocation5 + $0x60] sm:$0xff]
    %v69 = vld [vmem:[#allocation5 + $0x68] sm:$0xf]
    %v70 = vld [vmem:[#allocation5 + $0x6c] sm:$0xff]
    %v71 = vld [vmem:[#allocation5 + $0x74] sm:$0xff]
    %v72 = vld [vmem:[#allocation5 + $0x7c] sm:$0xff]
    %v73 = vld [vmem:[#allocation5 + $0x84] sm:$0xff]
    %v74 = vld [vmem:[#allocation5 + $0x8c] sm:$0xf]
    %v75 = vld [vmem:[#allocation5 + $0x90] sm:$0xff]
    %v76 = vld [vmem:[#allocation5 + $0x98] sm:$0xff]
    %v77 = vld [vmem:[#allocation5 + $0xa0] sm:$0xff]
    %v78 = vld [vmem:[#allocation5 + $0xa8] sm:$0xff]
    %v79 = vld [vmem:[#allocation5 + $0xb0] sm:$0xf]
    %v80 = vld [vmem:[#allocation5 + $0xb4] sm:$0xff]
    %v81 = vld [vmem:[#allocation5 + $0xbc] sm:$0xff]
    %v82 = vld [vmem:[#allocation5 + $0xc4] sm:$0xff]
    %v83 = vld [vmem:[#allocation5 + $0xcc] sm:$0xff]
    %v84 = vld [vmem:[#allocation5 + $0xd4] sm:$0xf]
    %v85 = vld [vmem:[#allocation5 + $0xd8] sm:$0xff]
    %v86 = vld [vmem:[#allocation5 + $0xe0] sm:$0xff]
    %v87 = vld [vmem:[#allocation5 + $0xe8] sm:$0xff]
    %v88 = vld [vmem:[#allocation5 + $0xf0] sm:$0xff]
    %v89 = vld [vmem:[#allocation5 + $0xf8] sm:$0xf]
    %v90 = vld [vmem:[#allocation5 + $0xfc] sm:$0xff]
    %v91 = vld [vmem:[#allocation5 + $0x104] sm:$0xff]
    %v92 = vld [vmem:[#allocation5 + $0x10c] sm:$0xff]
    %v93 = vld [vmem:[#allocation5 + $0x114] sm:$0xff]
    %v94 = vld [vmem:[#allocation5 + $0x11c] sm:$0xf]
    %v95 = vld [vmem:[#allocation5 + $0x120] sm:$0xff]
    %v96 = vld [vmem:[#allocation5 + $0x128] sm:$0xff]
    %v97 = vld [vmem:[#allocation5 + $0x130] sm:$0xff]
    %v98 = vld [vmem:[#allocation5 + $0x138] sm:$0xff]
    %v99 = vld [vmem:[#allocation5 + $0x140] sm:$0xf]
    %v100 = vld [vmem:[#allocation5 + $0x144] sm:$0xff]
    %v101 = vld [vmem:[#allocation5 + $0x14c] sm:$0xff]
    %v102 = vld [vmem:[#allocation5 + $0x154] sm:$0xff]
    %v103 = vld [vmem:[#allocation5 + $0x15c] sm:$0xff]
    %v104 = vld [vmem:[#allocation5 + $0x164] sm:$0xf]
    %v105 = vld [vmem:[#allocation5 + $0x168] sm:$0xff]
    %v106 = vld [vmem:[#allocation5 + $0x170] sm:$0xff]
    %v107 = vld [vmem:[#allocation5 + $0x178] sm:$0xff]
    %v108 = vld [vmem:[#allocation5 + $0x180] sm:$0xff]
    %v109 = vld [vmem:[#allocation5 + $0x188] sm:$0xf]
    %v110 = vld [vmem:[#allocation5 + $0x18c] sm:$0xff]
    %v111 = vld [vmem:[#allocation5 + $0x194] sm:$0xff]
    %v112 = vld [vmem:[#allocation5 + $0x19c] sm:$0xff]
    %v113 = vld [vmem:[#allocation5 + $0x1a4] sm:$0xff]
    %v114 = vld [vmem:[#allocation5 + $0x1ac] sm:$0xf]
    %v115 = vld [vmem:[#allocation5 + $0x1b0] sm:$0xff]
    %v116 = vld [vmem:[#allocation5 + $0x1b8] sm:$0xff]
    %v117 = vld [vmem:[#allocation5 + $0x1c0] sm:$0xff]
    %v118 = vld [vmem:[#allocation5 + $0x1c8] sm:$0xff]
    %v119 = vld [vmem:[#allocation5 + $0x1d0] sm:$0xf]
    %v120 = vld [vmem:[#allocation5 + $0x1d4] sm:$0xff]
    %v121 = vld [vmem:[#allocation5 + $0x1dc] sm:$0xff]
    %v122 = vld [vmem:[#allocation5 + $0x1e4] sm:$0xff]
    %v123 = vld [vmem:[#allocation5 + $0x1ec] sm:$0xff]
    %v124 = vld [vmem:[#allocation5 + $0x1f4] sm:$0xf]
    %v125 = vld [vmem:[#allocation5 + $0x1f8] sm:$0xff]
    %v126 = vld [vmem:[#allocation5 + $0x200] sm:$0xff]
    %v127 = vld [vmem:[#allocation5 + $0x208] sm:$0xff]
    %v128 = vld [vmem:[#allocation5 + $0x210] sm:$0xff]
    %v129 = vld [vmem:[#allocation5 + $0x218] sm:$0xf]
    %v130 = vld [vmem:[#allocation5 + $0x21c] sm:$0xff]
    %v131 = vld [vmem:[#allocation5 + $0x224] sm:$0xff]
    %v132 = vld [vmem:[#allocation5 + $0x22c] sm:$0xff]
    %v133 = vld [vmem:[#allocation5 + $0x234] sm:$0xff]
    %v134 = vld [vmem:[#allocation5 + $0x23c] sm:$0xf]
    %v135 = vld [vmem:[#allocation5 + $0x240] sm:$0xff]
    %v136 = vld [vmem:[#allocation5 + $0x248] sm:$0xff]
    %v137 = vld [vmem:[#allocation5 + $0x250] sm:$0xff]
    %v138 = vld [vmem:[#allocation5 + $0x258] sm:$0xff]
    %v139 = vld [vmem:[#allocation5 + $0x260] sm:$0xf]
    %v140 = vld [vmem:[#allocation5 + $0x264] sm:$0xff]
    %v141 = vld [vmem:[#allocation5 + $0x26c] sm:$0xff]
    %v142 = vld [vmem:[#allocation5 + $0x274] sm:$0xff]
    %v143 = vld [vmem:[#allocation5 + $0x27c] sm:$0xff]
    %v144 = vld [vmem:[#allocation5 + $0x284] sm:$0xf]
    %v145 = vld [vmem:[#allocation5 + $0x288] sm:$0xff]
    %v146 = vld [vmem:[#allocation5 + $0x290] sm:$0xff]
    %v147 = vld [vmem:[#allocation5 + $0x298] sm:$0xff]
    %v148 = vld [vmem:[#allocation5 + $0x2a0] sm:$0xff]
    %v149 = vld [vmem:[#allocation5 + $0x2a8] sm:$0xf]
    %v150 = vld [vmem:[#allocation5 + $0x2ac] sm:$0xff]
    %v151 = vld [vmem:[#allocation5 + $0x2b4] sm:$0xff]
    %v152 = vld [vmem:[#allocation5 + $0x2bc] sm:$0xff]
    %v153 = vld [vmem:[#allocation5 + $0x2c4] sm:$0xff]
    %v154 = vld [vmem:[#allocation5 + $0x2cc] sm:$0xf]
    %v155 = vld [vmem:[#allocation5 + $0x2d0] sm:$0xff]
    %v156 = vld [vmem:[#allocation5 + $0x2d8] sm:$0xff]
    %v157 = vld [vmem:[#allocation5 + $0x2e0] sm:$0xff]
    %v158 = vld [vmem:[#allocation5 + $0x2e8] sm:$0xff]
    %v159 = vld [vmem:[#allocation5 + $0x2f0] sm:$0xf]
    %v160 = vld [vmem:[#allocation5 + $0x2f4] sm:$0xff]
    %v161 = vld [vmem:[#allocation5 + $0x2fc] sm:$0xff]
    %v162 = vld [vmem:[#allocation5 + $0x304] sm:$0xff]
    %v163 = vld [vmem:[#allocation5 + $0x30c] sm:$0xff]
    %v164 = vld [vmem:[#allocation5 + $0x314] sm:$0xf]
    %v165 = vld [vmem:[#allocation5 + $0x318] sm:$0xff]
    %v166 = vld [vmem:[#allocation5 + $0x320] sm:$0xff]
    %v167 = vld [vmem:[#allocation5 + $0x328] sm:$0xff]
    %v168 = vld [vmem:[#allocation5 + $0x330] sm:$0xff]
    %v169 = vld [vmem:[#allocation5 + $0x338] sm:$0xf]
    %v170 = vld [vmem:[#allocation5 + $0x33c] sm:$0xff]
    %v171 = vld [vmem:[#allocation5 + $0x344] sm:$0xff]
    %v172 = vld [vmem:[#allocation5 + $0x34c] sm:$0xff]
    %v173 = vld [vmem:[#allocation5 + $0x354] sm:$0xff]
    %v174 = vld [vmem:[#allocation5 + $0x35c] sm:$0xf]
    %v175 = vld [vmem:[#allocation5 + $0x360] sm:$0xff]
    %v176 = vld [vmem:[#allocation5 + $0x368] sm:$0xff]
    %v177 = vld [vmem:[#allocation5 + $0x370] sm:$0xff]
    %v178 = vld [vmem:[#allocation5 + $0x378] sm:$0xff]
    %v179 = vld [vmem:[#allocation5 + $0x380] sm:$0xf]
    %v180 = vld [vmem:[#allocation5 + $0x384] sm:$0xff]
    %v181 = vld [vmem:[#allocation5 + $0x38c] sm:$0xff]
    %v182 = vld [vmem:[#allocation5 + $0x394] sm:$0xff]
    %v183 = vld [vmem:[#allocation5 + $0x39c] sm:$0xff]
    %v184 = vld [vmem:[#allocation5 + $0x3a4] sm:$0xf]
    %v185 = vld [vmem:[#allocation5 + $0x3a8] sm:$0xff]
    %v186 = vld [vmem:[#allocation5 + $0x3b0] sm:$0xff]
    %v187 = vld [vmem:[#allocation5 + $0x3b8] sm:$0xff]
    %v188 = vld [vmem:[#allocation5 + $0x3c0] sm:$0xff]
    %v189 = vld [vmem:[#allocation5 + $0x3c8] sm:$0xf]
    %v190 = vld [vmem:[#allocation5 + $0x3cc] sm:$0xff]
    %v191 = vld [vmem:[#allocation5 + $0x3d4] sm:$0xff]
    %v192 = vld [vmem:[#allocation5 + $0x3dc] sm:$0xff]
    %v193 = vld [vmem:[#allocation5 + $0x3e4] sm:$0xff]
    %v194 = vld [vmem:[#allocation5 + $0x3ec] sm:$0xf]
    %v195 = vld [vmem:[#allocation5 + $0x3f0] sm:$0xff]
    %v196 = vld [vmem:[#allocation5 + $0x3f8] sm:$0xff]
    %v197 = vld [vmem:[#allocation5 + $0x400] sm:$0xff]
    %v198 = vld [vmem:[#allocation5 + $0x408] sm:$0xff]
    %v199 = vld [vmem:[#allocation5 + $0x410] sm:$0xf]
    %v200 = vld [vmem:[#allocation5 + $0x414] sm:$0xff]
    %v201 = vld [vmem:[#allocation5 + $0x41c] sm:$0xff]
    %v202 = vld [vmem:[#allocation5 + $0x424] sm:$0xff]
    %v203 = vld [vmem:[#allocation5 + $0x42c] sm:$0xff]
    %v204 = vld [vmem:[#allocation5 + $0x434] sm:$0xf]
    %v205 = vld [vmem:[#allocation5 + $0x438] sm:$0xff]
    %v206 = vld [vmem:[#allocation5 + $0x440] sm:$0xff]
    %v207 = vld [vmem:[#allocation5 + $0x448] sm:$0xff]
    %v208 = vld [vmem:[#allocation5 + $0x450] sm:$0xff]
    %v209 = vld [vmem:[#allocation5 + $0x458] sm:$0xf]
    %v210 = vld [vmem:[#allocation5 + $0x45c] sm:$0xff]
    %v211 = vld [vmem:[#allocation5 + $0x464] sm:$0xff]
    %v212 = vld [vmem:[#allocation5 + $0x46c] sm:$0xff]
    %v213 = vld [vmem:[#allocation5 + $0x474] sm:$0xff]
    %v214 = vld [vmem:[#allocation5 + $0x47c] sm:$0xf]
    %v375 = vunpack.c.l.b16 %v55
    %v376 = vunpack.c.h.b16 %v55
    %v377 = vunpack.c.l.b16 %v56
    %v378 = vunpack.c.h.b16 %v56
    %v379 = vunpack.c.l.b16 %v57
    %v380 = vunpack.c.h.b16 %v57
    %v381 = vunpack.c.l.b16 %v58
    %v382 = vunpack.c.h.b16 %v58
    %v383 = vunpack.c.l.b16 %v59
    %v384 = vunpack.c.l.b16 %v60
    %v385 = vunpack.c.h.b16 %v60
    %v386 = vunpack.c.l.b16 %v61
    %v387 = vunpack.c.h.b16 %v61
    %v388 = vunpack.c.l.b16 %v62
    %v389 = vunpack.c.h.b16 %v62
    %v390 = vunpack.c.l.b16 %v63
    %v391 = vunpack.c.h.b16 %v63
    %v392 = vunpack.c.l.b16 %v64
    %v393 = vunpack.c.l.b16 %v65
    %v394 = vunpack.c.h.b16 %v65
    %v395 = vunpack.c.l.b16 %v66
    %v396 = vunpack.c.h.b16 %v66
    %v397 = vunpack.c.l.b16 %v67
    %v398 = vunpack.c.h.b16 %v67
    %v399 = vunpack.c.l.b16 %v68
    %v400 = vunpack.c.h.b16 %v68
    %v401 = vunpack.c.l.b16 %v69
    %v402 = vunpack.c.l.b16 %v70
    %v403 = vunpack.c.h.b16 %v70
    %v404 = vunpack.c.l.b16 %v71
    %v405 = vunpack.c.h.b16 %v71
    %v406 = vunpack.c.l.b16 %v72
    %v407 = vunpack.c.h.b16 %v72
    %v408 = vunpack.c.l.b16 %v73
    %v409 = vunpack.c.h.b16 %v73
    %v410 = vunpack.c.l.b16 %v74
    %v411 = vunpack.c.l.b16 %v75
    %v412 = vunpack.c.h.b16 %v75
    %v413 = vunpack.c.l.b16 %v76
    %v414 = vunpack.c.h.b16 %v76
    %v415 = vunpack.c.l.b16 %v77
    %v416 = vunpack.c.h.b16 %v77
    %v417 = vunpack.c.l.b16 %v78
    %v418 = vunpack.c.h.b16 %v78
    %v419 = vunpack.c.l.b16 %v79
    %v420 = vunpack.c.l.b16 %v80
    %v421 = vunpack.c.h.b16 %v80
    %v422 = vunpack.c.l.b16 %v81
    %v423 = vunpack.c.h.b16 %v81
    %v424 = vunpack.c.l.b16 %v82
    %v425 = vunpack.c.h.b16 %v82
    %v426 = vunpack.c.l.b16 %v83
    %v427 = vunpack.c.h.b16 %v83
    %v428 = vunpack.c.l.b16 %v84
    %v429 = vunpack.c.l.b16 %v85
    %v430 = vunpack.c.h.b16 %v85
    %v431 = vunpack.c.l.b16 %v86
    %v432 = vunpack.c.h.b16 %v86
    %v433 = vunpack.c.l.b16 %v87
    %v434 = vunpack.c.h.b16 %v87
    %v435 = vunpack.c.l.b16 %v88
    %v436 = vunpack.c.h.b16 %v88
    %v437 = vunpack.c.l.b16 %v89
    %v438 = vunpack.c.l.b16 %v90
    %v439 = vunpack.c.h.b16 %v90
    %v440 = vunpack.c.l.b16 %v91
    %v441 = vunpack.c.h.b16 %v91
    %v442 = vunpack.c.l.b16 %v92
    %v443 = vunpack.c.h.b16 %v92
    %v444 = vunpack.c.l.b16 %v93
    %v445 = vunpack.c.h.b16 %v93
    %v446 = vunpack.c.l.b16 %v94
    %v447 = vunpack.c.l.b16 %v95
    %v448 = vunpack.c.h.b16 %v95
    %v449 = vunpack.c.l.b16 %v96
    %v450 = vunpack.c.h.b16 %v96
    %v451 = vunpack.c.l.b16 %v97
    %v452 = vunpack.c.h.b16 %v97
    %v453 = vunpack.c.l.b16 %v98
    %v454 = vunpack.c.h.b16 %v98
    %v455 = vunpack.c.l.b16 %v99
    %v456 = vunpack.c.l.b16 %v100
    %v457 = vunpack.c.h.b16 %v100
    %v458 = vunpack.c.l.b16 %v101
    %v459 = vunpack.c.h.b16 %v101
    %v460 = vunpack.c.l.b16 %v102
    %v461 = vunpack.c.h.b16 %v102
    %v462 = vunpack.c.l.b16 %v103
    %v463 = vunpack.c.h.b16 %v103
    %v464 = vunpack.c.l.b16 %v104
    %v465 = vunpack.c.l.b16 %v105
    %v466 = vunpack.c.h.b16 %v105
    %v467 = vunpack.c.l.b16 %v106
    %v468 = vunpack.c.h.b16 %v106
    %v469 = vunpack.c.l.b16 %v107
    %v470 = vunpack.c.h.b16 %v107
    %v471 = vunpack.c.l.b16 %v108
    %v472 = vunpack.c.h.b16 %v108
    %v473 = vunpack.c.l.b16 %v109
    %v474 = vunpack.c.l.b16 %v110
    %v475 = vunpack.c.h.b16 %v110
    %v476 = vunpack.c.l.b16 %v111
    %v477 = vunpack.c.h.b16 %v111
    %v478 = vunpack.c.l.b16 %v112
    %v479 = vunpack.c.h.b16 %v112
    %v480 = vunpack.c.l.b16 %v113
    %v481 = vunpack.c.h.b16 %v113
    %v482 = vunpack.c.l.b16 %v114
    %v483 = vunpack.c.l.b16 %v115
    %v484 = vunpack.c.h.b16 %v115
    %v485 = vunpack.c.l.b16 %v116
    %v486 = vunpack.c.h.b16 %v116
    %v487 = vunpack.c.l.b16 %v117
    %v488 = vunpack.c.h.b16 %v117
    %v489 = vunpack.c.l.b16 %v118
    %v490 = vunpack.c.h.b16 %v118
    %v491 = vunpack.c.l.b16 %v119
    %v492 = vunpack.c.l.b16 %v120
    %v493 = vunpack.c.h.b16 %v120
    %v494 = vunpack.c.l.b16 %v121
    %v495 = vunpack.c.h.b16 %v121
    %v496 = vunpack.c.l.b16 %v122
    %v497 = vunpack.c.h.b16 %v122
    %v498 = vunpack.c.l.b16 %v123
    %v499 = vunpack.c.h.b16 %v123
    %v500 = vunpack.c.l.b16 %v124
    %v501 = vunpack.c.l.b16 %v125
    %v502 = vunpack.c.h.b16 %v125
    %v503 = vunpack.c.l.b16 %v126
    %v504 = vunpack.c.h.b16 %v126
    %v505 = vunpack.c.l.b16 %v127
    %v506 = vunpack.c.h.b16 %v127
    %v507 = vunpack.c.l.b16 %v128
    %v508 = vunpack.c.h.b16 %v128
    %v509 = vunpack.c.l.b16 %v129
    %v510 = vunpack.c.l.b16 %v130
    %v511 = vunpack.c.h.b16 %v130
    %v512 = vunpack.c.l.b16 %v131
    %v513 = vunpack.c.h.b16 %v131
    %v514 = vunpack.c.l.b16 %v132
    %v515 = vunpack.c.h.b16 %v132
    %v516 = vunpack.c.l.b16 %v133
    %v517 = vunpack.c.h.b16 %v133
    %v518 = vunpack.c.l.b16 %v134
    %v519 = vunpack.c.l.b16 %v135
    %v520 = vunpack.c.h.b16 %v135
    %v521 = vunpack.c.l.b16 %v136
    %v522 = vunpack.c.h.b16 %v136
    %v523 = vunpack.c.l.b16 %v137
    %v524 = vunpack.c.h.b16 %v137
    %v525 = vunpack.c.l.b16 %v138
    %v526 = vunpack.c.h.b16 %v138
    %v527 = vunpack.c.l.b16 %v139
    %v528 = vunpack.c.l.b16 %v140
    %v529 = vunpack.c.h.b16 %v140
    %v530 = vunpack.c.l.b16 %v141
    %v531 = vunpack.c.h.b16 %v141
    %v532 = vunpack.c.l.b16 %v142
    %v533 = vunpack.c.h.b16 %v142
    %v534 = vunpack.c.l.b16 %v143
    %v535 = vunpack.c.h.b16 %v143
    %v536 = vunpack.c.l.b16 %v144
    %v537 = vunpack.c.l.b16 %v145
    %v538 = vunpack.c.h.b16 %v145
    %v539 = vunpack.c.l.b16 %v146
    %v540 = vunpack.c.h.b16 %v146
    %v541 = vunpack.c.l.b16 %v147
    %v542 = vunpack.c.h.b16 %v147
    %v543 = vunpack.c.l.b16 %v148
    %v544 = vunpack.c.h.b16 %v148
    %v545 = vunpack.c.l.b16 %v149
    %v546 = vunpack.c.l.b16 %v150
    %v547 = vunpack.c.h.b16 %v150
    %v548 = vunpack.c.l.b16 %v151
    %v549 = vunpack.c.h.b16 %v151
    %v550 = vunpack.c.l.b16 %v152
    %v551 = vunpack.c.h.b16 %v152
    %v552 = vunpack.c.l.b16 %v153
    %v553 = vunpack.c.h.b16 %v153
    %v554 = vunpack.c.l.b16 %v154
    %v555 = vunpack.c.l.b16 %v155
    %v556 = vunpack.c.h.b16 %v155
    %v557 = vunpack.c.l.b16 %v156
    %v558 = vunpack.c.h.b16 %v156
    %v559 = vunpack.c.l.b16 %v157
    %v560 = vunpack.c.h.b16 %v157
    %v561 = vunpack.c.l.b16 %v158
    %v562 = vunpack.c.h.b16 %v158
    %v563 = vunpack.c.l.b16 %v159
    %v564 = vunpack.c.l.b16 %v160
    %v565 = vunpack.c.h.b16 %v160
    %v566 = vunpack.c.l.b16 %v161
    %v567 = vunpack.c.h.b16 %v161
    %v568 = vunpack.c.l.b16 %v162
    %v569 = vunpack.c.h.b16 %v162
    %v570 = vunpack.c.l.b16 %v163
    %v571 = vunpack.c.h.b16 %v163
    %v572 = vunpack.c.l.b16 %v164
    %v573 = vunpack.c.l.b16 %v165
    %v574 = vunpack.c.h.b16 %v165
    %v575 = vunpack.c.l.b16 %v166
    %v576 = vunpack.c.h.b16 %v166
    %v577 = vunpack.c.l.b16 %v167
    %v578 = vunpack.c.h.b16 %v167
    %v579 = vunpack.c.l.b16 %v168
    %v580 = vunpack.c.h.b16 %v168
    %v581 = vunpack.c.l.b16 %v169
    %v582 = vunpack.c.l.b16 %v170
    %v583 = vunpack.c.h.b16 %v170
    %v584 = vunpack.c.l.b16 %v171
    %v585 = vunpack.c.h.b16 %v171
    %v586 = vunpack.c.l.b16 %v172
    %v587 = vunpack.c.h.b16 %v172
    %v588 = vunpack.c.l.b16 %v173
    %v589 = vunpack.c.h.b16 %v173
    %v590 = vunpack.c.l.b16 %v174
    %v591 = vunpack.c.l.b16 %v175
    %v592 = vunpack.c.h.b16 %v175
    %v593 = vunpack.c.l.b16 %v176
    %v594 = vunpack.c.h.b16 %v176
    %v595 = vunpack.c.l.b16 %v177
    %v596 = vunpack.c.h.b16 %v177
    %v597 = vunpack.c.l.b16 %v178
    %v598 = vunpack.c.h.b16 %v178
    %v599 = vunpack.c.l.b16 %v179
    %v600 = vunpack.c.l.b16 %v180
    %v601 = vunpack.c.h.b16 %v180
    %v602 = vunpack.c.l.b16 %v181
    %v603 = vunpack.c.h.b16 %v181
    %v604 = vunpack.c.l.b16 %v182
    %v605 = vunpack.c.h.b16 %v182
    %v606 = vunpack.c.l.b16 %v183
    %v607 = vunpack.c.h.b16 %v183
    %v608 = vunpack.c.l.b16 %v184
    %v609 = vunpack.c.l.b16 %v185
    %v610 = vunpack.c.h.b16 %v185
    %v611 = vunpack.c.l.b16 %v186
    %v612 = vunpack.c.h.b16 %v186
    %v613 = vunpack.c.l.b16 %v187
    %v614 = vunpack.c.h.b16 %v187
    %v615 = vunpack.c.l.b16 %v188
    %v616 = vunpack.c.h.b16 %v188
    %v617 = vunpack.c.l.b16 %v189
    %v618 = vunpack.c.l.b16 %v190
    %v619 = vunpack.c.h.b16 %v190
    %v620 = vunpack.c.l.b16 %v191
    %v621 = vunpack.c.h.b16 %v191
    %v622 = vunpack.c.l.b16 %v192
    %v623 = vunpack.c.h.b16 %v192
    %v624 = vunpack.c.l.b16 %v193
    %v625 = vunpack.c.h.b16 %v193
    %v626 = vunpack.c.l.b16 %v194
    %v627 = vunpack.c.l.b16 %v195
    %v628 = vunpack.c.h.b16 %v195
    %v629 = vunpack.c.l.b16 %v196
    %v630 = vunpack.c.h.b16 %v196
    %v631 = vunpack.c.l.b16 %v197
    %v632 = vunpack.c.h.b16 %v197
    %v633 = vunpack.c.l.b16 %v198
    %v634 = vunpack.c.h.b16 %v198
    %v635 = vunpack.c.l.b16 %v199
    %v636 = vunpack.c.l.b16 %v200
    %v637 = vunpack.c.h.b16 %v200
    %v638 = vunpack.c.l.b16 %v201
    %v639 = vunpack.c.h.b16 %v201
    %v640 = vunpack.c.l.b16 %v202
    %v641 = vunpack.c.h.b16 %v202
    %v642 = vunpack.c.l.b16 %v203
    %v643 = vunpack.c.h.b16 %v203
    %v644 = vunpack.c.l.b16 %v204
    %v645 = vunpack.c.l.b16 %v205
    %v646 = vunpack.c.h.b16 %v205
    %v647 = vunpack.c.l.b16 %v206
    %v648 = vunpack.c.h.b16 %v206
    %v649 = vunpack.c.l.b16 %v207
    %v650 = vunpack.c.h.b16 %v207
    %v651 = vunpack.c.l.b16 %v208
    %v652 = vunpack.c.h.b16 %v208
    %v653 = vunpack.c.l.b16 %v209
    %v654 = vunpack.c.l.b16 %v210
    %v655 = vunpack.c.h.b16 %v210
    %v656 = vunpack.c.l.b16 %v211
    %v657 = vunpack.c.h.b16 %v211
    %v658 = vunpack.c.l.b16 %v212
    %v659 = vunpack.c.h.b16 %v212
    %v660 = vunpack.c.l.b16 %v213
    %v661 = vunpack.c.h.b16 %v213
    %v662 = vunpack.c.l.b16 %v214
    %v663 = vpack.c.b16 %v384, %v375
    %v664 = vpack.c.b16 %v385, %v376
    %v665 = vpack.c.b16 %v386, %v377
    %v666 = vpack.c.b16 %v387, %v378
    %v667 = vpack.c.b16 %v388, %v379
    %v668 = vpack.c.b16 %v389, %v380
    %v669 = vpack.c.b16 %v390, %v381
    %v670 = vpack.c.b16 %v391, %v382
    %v671 = vpack.c.b16 %v392, %v383
    %v672 = vpack.c.b16 %v402, %v393
    %v673 = vpack.c.b16 %v403, %v394
    %v674 = vpack.c.b16 %v404, %v395
    %v675 = vpack.c.b16 %v405, %v396
    %v676 = vpack.c.b16 %v406, %v397
    %v677 = vpack.c.b16 %v407, %v398
    %v678 = vpack.c.b16 %v408, %v399
    %v679 = vpack.c.b16 %v409, %v400
    %v680 = vpack.c.b16 %v410, %v401
    %v681 = vpack.c.b16 %v420, %v411
    %v682 = vpack.c.b16 %v421, %v412
    %v683 = vpack.c.b16 %v422, %v413
    %v684 = vpack.c.b16 %v423, %v414
    %v685 = vpack.c.b16 %v424, %v415
    %v686 = vpack.c.b16 %v425, %v416
    %v687 = vpack.c.b16 %v426, %v417
    %v688 = vpack.c.b16 %v427, %v418
    %v689 = vpack.c.b16 %v428, %v419
    %v690 = vpack.c.b16 %v438, %v429
    %v691 = vpack.c.b16 %v439, %v430
    %v692 = vpack.c.b16 %v440, %v431
    %v693 = vpack.c.b16 %v441, %v432
    %v694 = vpack.c.b16 %v442, %v433
    %v695 = vpack.c.b16 %v443, %v434
    %v696 = vpack.c.b16 %v444, %v435
    %v697 = vpack.c.b16 %v445, %v436
    %v698 = vpack.c.b16 %v446, %v437
    %v699 = vpack.c.b16 %v456, %v447
    %v700 = vpack.c.b16 %v457, %v448
    %v701 = vpack.c.b16 %v458, %v449
    %v702 = vpack.c.b16 %v459, %v450
    %v703 = vpack.c.b16 %v460, %v451
    %v704 = vpack.c.b16 %v461, %v452
    %v705 = vpack.c.b16 %v462, %v453
    %v706 = vpack.c.b16 %v463, %v454
    %v707 = vpack.c.b16 %v464, %v455
    %v708 = vpack.c.b16 %v474, %v465
    %v709 = vpack.c.b16 %v475, %v466
    %v710 = vpack.c.b16 %v476, %v467
    %v711 = vpack.c.b16 %v477, %v468
    %v712 = vpack.c.b16 %v478, %v469
    %v713 = vpack.c.b16 %v479, %v470
    %v714 = vpack.c.b16 %v480, %v471
    %v715 = vpack.c.b16 %v481, %v472
    %v716 = vpack.c.b16 %v482, %v473
    %v717 = vpack.c.b16 %v492, %v483
    %v718 = vpack.c.b16 %v493, %v484
    %v719 = vpack.c.b16 %v494, %v485
    %v720 = vpack.c.b16 %v495, %v486
    %v721 = vpack.c.b16 %v496, %v487
    %v722 = vpack.c.b16 %v497, %v488
    %v723 = vpack.c.b16 %v498, %v489
    %v724 = vpack.c.b16 %v499, %v490
    %v725 = vpack.c.b16 %v500, %v491
    %v726 = vpack.c.b16 %v510, %v501
    %v727 = vpack.c.b16 %v511, %v502
    %v728 = vpack.c.b16 %v512, %v503
    %v729 = vpack.c.b16 %v513, %v504
    %v730 = vpack.c.b16 %v514, %v505
    %v731 = vpack.c.b16 %v515, %v506
    %v732 = vpack.c.b16 %v516, %v507
    %v733 = vpack.c.b16 %v517, %v508
    %v734 = vpack.c.b16 %v518, %v509
    %v735 = vpack.c.b16 %v528, %v519
    %v736 = vpack.c.b16 %v529, %v520
    %v737 = vpack.c.b16 %v530, %v521
    %v738 = vpack.c.b16 %v531, %v522
    %v739 = vpack.c.b16 %v532, %v523
    %v740 = vpack.c.b16 %v533, %v524
    %v741 = vpack.c.b16 %v534, %v525
    %v742 = vpack.c.b16 %v535, %v526
    %v743 = vpack.c.b16 %v536, %v527
    %v744 = vpack.c.b16 %v546, %v537
    %v745 = vpack.c.b16 %v547, %v538
    %v746 = vpack.c.b16 %v548, %v539
    %v747 = vpack.c.b16 %v549, %v540
    %v748 = vpack.c.b16 %v550, %v541
    %v749 = vpack.c.b16 %v551, %v542
    %v750 = vpack.c.b16 %v552, %v543
    %v751 = vpack.c.b16 %v553, %v544
    %v752 = vpack.c.b16 %v554, %v545
    %v753 = vpack.c.b16 %v564, %v555
    %v754 = vpack.c.b16 %v565, %v556
    %v755 = vpack.c.b16 %v566, %v557
    %v756 = vpack.c.b16 %v567, %v558
    %v757 = vpack.c.b16 %v568, %v559
    %v758 = vpack.c.b16 %v569, %v560
    %v759 = vpack.c.b16 %v570, %v561
    %v760 = vpack.c.b16 %v571, %v562
    %v761 = vpack.c.b16 %v572, %v563
    %v762 = vpack.c.b16 %v582, %v573
    %v763 = vpack.c.b16 %v583, %v574
    %v764 = vpack.c.b16 %v584, %v575
    %v765 = vpack.c.b16 %v585, %v576
    %v766 = vpack.c.b16 %v586, %v577
    %v767 = vpack.c.b16 %v587, %v578
    %v768 = vpack.c.b16 %v588, %v579
    %v769 = vpack.c.b16 %v589, %v580
    %v770 = vpack.c.b16 %v590, %v581
    %v771 = vpack.c.b16 %v600, %v591
    %v772 = vpack.c.b16 %v601, %v592
    %v773 = vpack.c.b16 %v602, %v593
    %v774 = vpack.c.b16 %v603, %v594
    %v775 = vpack.c.b16 %v604, %v595
    %v776 = vpack.c.b16 %v605, %v596
    %v777 = vpack.c.b16 %v606, %v597
    %v778 = vpack.c.b16 %v607, %v598
    %v779 = vpack.c.b16 %v608, %v599
    %v780 = vpack.c.b16 %v618, %v609
    %v781 = vpack.c.b16 %v619, %v610
    %v782 = vpack.c.b16 %v620, %v611
    %v783 = vpack.c.b16 %v621, %v612
    %v784 = vpack.c.b16 %v622, %v613
    %v785 = vpack.c.b16 %v623, %v614
    %v786 = vpack.c.b16 %v624, %v615
    %v787 = vpack.c.b16 %v625, %v616
    %v788 = vpack.c.b16 %v626, %v617
    %v789 = vpack.c.b16 %v636, %v627
    %v790 = vpack.c.b16 %v637, %v628
    %v791 = vpack.c.b16 %v638, %v629
    %v792 = vpack.c.b16 %v639, %v630
    %v793 = vpack.c.b16 %v640, %v631
    %v794 = vpack.c.b16 %v641, %v632
    %v795 = vpack.c.b16 %v642, %v633
    %v796 = vpack.c.b16 %v643, %v634
    %v797 = vpack.c.b16 %v644, %v635
    %v798 = vpack.c.b16 %v654, %v645
    %v799 = vpack.c.b16 %v655, %v646
    %v800 = vpack.c.b16 %v656, %v647
    %v801 = vpack.c.b16 %v657, %v648
    %v802 = vpack.c.b16 %v658, %v649
    %v803 = vpack.c.b16 %v659, %v650
    %v804 = vpack.c.b16 %v660, %v651
    %v805 = vpack.c.b16 %v661, %v652
    %v806 = vpack.c.b16 %v662, %v653
    %951 = vmatpush.bf16.msra.mxu0 %v726
    %952 = vmatpush.bf16.msra.mxu0 %v717
    %953 = vmatpush.bf16.msra.mxu0 %v708
    %954 = vmatpush.bf16.msra.mxu0 %v699
    %955 = vmatpush.bf16.msra.mxu0 %v690
    %956 = vmatpush.bf16.msra.mxu0 %v681
    %957 = vmatpush.bf16.msra.mxu0 %v672
    %958 = vmatpush.bf16.msra.mxu0 %v663
    %959 = vmatmul.bf16.gmra.mxu0 %v53
    %v960 = vpop.f32.mrf.mxu0
    %v961 = vadd.f32 0.0, %v960
    %v962 = vpop.f32.mrf.mxu0
    %963 = vdwg.mxu0
    %964 = vmatpush.bf16.msra.mxu0 %v798
    %965 = vmatpush.bf16.msra.mxu0 %v789
    %966 = vmatpush.bf16.msra.mxu0 %v780
    %967 = vmatpush.bf16.msra.mxu0 %v771
    %968 = vmatpush.bf16.msra.mxu0 %v762
    %969 = vmatpush.bf16.msra.mxu0 %v753
    %970 = vmatpush.bf16.msra.mxu0 %v744
    %971 = vmatpush.bf16.msra.mxu0 %v735
    %972 = vmatmul.bf16.gmra.mxu0 %v54
    %v973 = vpop.f32.mrf.mxu0
    %v974 = vadd.f32 %v961, %v973
    %v975 = vpop.f32.mrf.mxu0
    %976 = vdwg.mxu0
    %977 = vmatpush.bf16.msra.mxu0 %v727
    %978 = vmatpush.bf16.msra.mxu0 %v718
    %979 = vmatpush.bf16.msra.mxu0 %v709
    %980 = vmatpush.bf16.msra.mxu0 %v700
    %981 = vmatpush.bf16.msra.mxu0 %v691
    %982 = vmatpush.bf16.msra.mxu0 %v682
    %983 = vmatpush.bf16.msra.mxu0 %v673
    %984 = vmatpush.bf16.msra.mxu0 %v664
    %985 = vmatmul.bf16.gmra.mxu0 %v53
    %v986 = vpop.f32.mrf.mxu0
    %v987 = vadd.f32 0.0, %v986
    %v988 = vpop.f32.mrf.mxu0
    %989 = vdwg.mxu0
    %990 = vmatpush.bf16.msra.mxu0 %v799
    %991 = vmatpush.bf16.msra.mxu0 %v790
    %992 = vmatpush.bf16.msra.mxu0 %v781
    %993 = vmatpush.bf16.msra.mxu0 %v772
    %994 = vmatpush.bf16.msra.mxu0 %v763
    %995 = vmatpush.bf16.msra.mxu0 %v754
    %996 = vmatpush.bf16.msra.mxu0 %v745
    %997 = vmatpush.bf16.msra.mxu0 %v736
    %998 = vmatmul.bf16.gmra.mxu0 %v54
    %v999 = vpop.f32.mrf.mxu0
    %v1000 = vadd.f32 %v987, %v999
    %v1001 = vpop.f32.mrf.mxu0
    %1002 = vdwg.mxu0
    %1003 = vmatpush.bf16.msra.mxu0 %v728
    %1004 = vmatpush.bf16.msra.mxu0 %v719
    %1005 = vmatpush.bf16.msra.mxu0 %v710
    %1006 = vmatpush.bf16.msra.mxu0 %v701
    %1007 = vmatpush.bf16.msra.mxu0 %v692
    %1008 = vmatpush.bf16.msra.mxu0 %v683
    %1009 = vmatpush.bf16.msra.mxu0 %v674
    %1010 = vmatpush.bf16.msra.mxu0 %v665
    %1011 = vmatmul.bf16.gmra.mxu0 %v53
    %v1012 = vpop.f32.mrf.mxu0
    %v1013 = vadd.f32 0.0, %v1012
    %v1014 = vpop.f32.mrf.mxu0
    %1015 = vdwg.mxu0
    %1016 = vmatpush.bf16.msra.mxu0 %v800
    %1017 = vmatpush.bf16.msra.mxu0 %v791
    %1018 = vmatpush.bf16.msra.mxu0 %v782
    %1019 = vmatpush.bf16.msra.mxu0 %v773
    %1020 = vmatpush.bf16.msra.mxu0 %v764
    %1021 = vmatpush.bf16.msra.mxu0 %v755
    %1022 = vmatpush.bf16.msra.mxu0 %v746
    %1023 = vmatpush.bf16.msra.mxu0 %v737
    %1024 = vmatmul.bf16.gmra.mxu0 %v54
    %v1025 = vpop.f32.mrf.mxu0
    %v1026 = vadd.f32 %v1013, %v1025
    %v1027 = vpop.f32.mrf.mxu0
    %1028 = vdwg.mxu0
    %1029 = vmatpush.bf16.msra.mxu0 %v729
    %1030 = vmatpush.bf16.msra.mxu0 %v720
    %1031 = vmatpush.bf16.msra.mxu0 %v711
    %1032 = vmatpush.bf16.msra.mxu0 %v702
    %1033 = vmatpush.bf16.msra.mxu0 %v693
    %1034 = vmatpush.bf16.msra.mxu0 %v684
    %1035 = vmatpush.bf16.msra.mxu0 %v675
    %1036 = vmatpush.bf16.msra.mxu0 %v666
    %1037 = vmatmul.bf16.gmra.mxu0 %v53
    %v1038 = vpop.f32.mrf.mxu0
    %v1039 = vadd.f32 0.0, %v1038
    %v1040 = vpop.f32.mrf.mxu0
    %1041 = vdwg.mxu0
    %1042 = vmatpush.bf16.msra.mxu0 %v801
    %1043 = vmatpush.bf16.msra.mxu0 %v792
    %1044 = vmatpush.bf16.msra.mxu0 %v783
    %1045 = vmatpush.bf16.msra.mxu0 %v774
    %1046 = vmatpush.bf16.msra.mxu0 %v765
    %1047 = vmatpush.bf16.msra.mxu0 %v756
    %1048 = vmatpush.bf16.msra.mxu0 %v747
    %1049 = vmatpush.bf16.msra.mxu0 %v738
    %1050 = vmatmul.bf16.gmra.mxu0 %v54
    %v1051 = vpop.f32.mrf.mxu0
    %v1052 = vadd.f32 %v1039, %v1051
    %v1053 = vpop.f32.mrf.mxu0
    %1054 = vdwg.mxu0
    %1055 = vmatpush.bf16.msra.mxu0 %v730
    %1056 = vmatpush.bf16.msra.mxu0 %v721
    %1057 = vmatpush.bf16.msra.mxu0 %v712
    %1058 = vmatpush.bf16.msra.mxu0 %v703
    %1059 = vmatpush.bf16.msra.mxu0 %v694
    %1060 = vmatpush.bf16.msra.mxu0 %v685
    %1061 = vmatpush.bf16.msra.mxu0 %v676
    %1062 = vmatpush.bf16.msra.mxu0 %v667
    %1063 = vmatmul.bf16.gmra.mxu0 %v53
    %v1064 = vpop.f32.mrf.mxu0
    %v1065 = vadd.f32 0.0, %v1064
    %v1066 = vpop.f32.mrf.mxu0
    %1067 = vdwg.mxu0
    %1068 = vmatpush.bf16.msra.mxu0 %v802
    %1069 = vmatpush.bf16.msra.mxu0 %v793
    %1070 = vmatpush.bf16.msra.mxu0 %v784
    %1071 = vmatpush.bf16.msra.mxu0 %v775
    %1072 = vmatpush.bf16.msra.mxu0 %v766
    %1073 = vmatpush.bf16.msra.mxu0 %v757
    %1074 = vmatpush.bf16.msra.mxu0 %v748
    %1075 = vmatpush.bf16.msra.mxu0 %v739
    %1076 = vmatmul.bf16.gmra.mxu0 %v54
    %v1077 = vpop.f32.mrf.mxu0
    %v1078 = vadd.f32 %v1065, %v1077
    %v1079 = vpop.f32.mrf.mxu0
    %1080 = vdwg.mxu0
    %1081 = vmatpush.bf16.msra.mxu0 %v731
    %1082 = vmatpush.bf16.msra.mxu0 %v722
    %1083 = vmatpush.bf16.msra.mxu0 %v713
    %1084 = vmatpush.bf16.msra.mxu0 %v704
    %1085 = vmatpush.bf16.msra.mxu0 %v695
    %1086 = vmatpush.bf16.msra.mxu0 %v686
    %1087 = vmatpush.bf16.msra.mxu0 %v677
    %1088 = vmatpush.bf16.msra.mxu0 %v668
    %1089 = vmatmul.bf16.gmra.mxu0 %v53
    %v1090 = vpop.f32.mrf.mxu0
    %v1091 = vadd.f32 0.0, %v1090
    %v1092 = vpop.f32.mrf.mxu0
    %1093 = vdwg.mxu0
    %1094 = vmatpush.bf16.msra.mxu0 %v803
    %1095 = vmatpush.bf16.msra.mxu0 %v794
    %1096 = vmatpush.bf16.msra.mxu0 %v785
    %1097 = vmatpush.bf16.msra.mxu0 %v776
    %1098 = vmatpush.bf16.msra.mxu0 %v767
    %1099 = vmatpush.bf16.msra.mxu0 %v758
    %1100 = vmatpush.bf16.msra.mxu0 %v749
    %1101 = vmatpush.bf16.msra.mxu0 %v740
    %1102 = vmatmul.bf16.gmra.mxu0 %v54
    %v1103 = vpop.f32.mrf.mxu0
    %v1104 = vadd.f32 %v1091, %v1103
    %v1105 = vpop.f32.mrf.mxu0
    %1106 = vdwg.mxu0
    %1107 = vmatpush.bf16.msra.mxu0 %v732
    %1108 = vmatpush.bf16.msra.mxu0 %v723
    %1109 = vmatpush.bf16.msra.mxu0 %v714
    %1110 = vmatpush.bf16.msra.mxu0 %v705
    %1111 = vmatpush.bf16.msra.mxu0 %v696
    %1112 = vmatpush.bf16.msra.mxu0 %v687
    %1113 = vmatpush.bf16.msra.mxu0 %v678
    %1114 = vmatpush.bf16.msra.mxu0 %v669
    %1115 = vmatmul.bf16.gmra.mxu0 %v53
    %v1116 = vpop.f32.mrf.mxu0
    %v1117 = vadd.f32 0.0, %v1116
    %v1118 = vpop.f32.mrf.mxu0
    %1119 = vdwg.mxu0
    %1120 = vmatpush.bf16.msra.mxu0 %v804
    %1121 = vmatpush.bf16.msra.mxu0 %v795
    %1122 = vmatpush.bf16.msra.mxu0 %v786
    %1123 = vmatpush.bf16.msra.mxu0 %v777
    %1124 = vmatpush.bf16.msra.mxu0 %v768
    %1125 = vmatpush.bf16.msra.mxu0 %v759
    %1126 = vmatpush.bf16.msra.mxu0 %v750
    %1127 = vmatpush.bf16.msra.mxu0 %v741
    %1128 = vmatmul.bf16.gmra.mxu0 %v54
    %v1129 = vpop.f32.mrf.mxu0
    %v1130 = vadd.f32 %v1117, %v1129
    %v1131 = vpop.f32.mrf.mxu0
    %1132 = vdwg.mxu0
    %1133 = vmatpush.bf16.msra.mxu0 %v733
    %1134 = vmatpush.bf16.msra.mxu0 %v724
    %1135 = vmatpush.bf16.msra.mxu0 %v715
    %1136 = vmatpush.bf16.msra.mxu0 %v706
    %1137 = vmatpush.bf16.msra.mxu0 %v697
    %1138 = vmatpush.bf16.msra.mxu0 %v688
    %1139 = vmatpush.bf16.msra.mxu0 %v679
    %1140 = vmatpush.bf16.msra.mxu0 %v670
    %1141 = vmatmul.bf16.gmra.mxu0 %v53
    %v1142 = vpop.f32.mrf.mxu0
    %v1143 = vadd.f32 0.0, %v1142
    %v1144 = vpop.f32.mrf.mxu0
    %1145 = vdwg.mxu0
    %1146 = vmatpush.bf16.msra.mxu0 %v805
    %1147 = vmatpush.bf16.msra.mxu0 %v796
    %1148 = vmatpush.bf16.msra.mxu0 %v787
    %1149 = vmatpush.bf16.msra.mxu0 %v778
    %1150 = vmatpush.bf16.msra.mxu0 %v769
    %1151 = vmatpush.bf16.msra.mxu0 %v760
    %1152 = vmatpush.bf16.msra.mxu0 %v751
    %1153 = vmatpush.bf16.msra.mxu0 %v742
    %1154 = vmatmul.bf16.gmra.mxu0 %v54
    %v1155 = vpop.f32.mrf.mxu0
    %v1156 = vadd.f32 %v1143, %v1155
    %v1157 = vpop.f32.mrf.mxu0
    %1158 = vdwg.mxu0
    %1159 = vmatpush.bf16.msra.mxu0 %v734
    %1160 = vmatpush.bf16.msra.mxu0 %v725
    %1161 = vmatpush.bf16.msra.mxu0 %v716
    %1162 = vmatpush.bf16.msra.mxu0 %v707
    %1163 = vmatpush.bf16.msra.mxu0 %v698
    %1164 = vmatpush.bf16.msra.mxu0 %v689
    %1165 = vmatpush.bf16.msra.mxu0 %v680
    %1166 = vmatpush.bf16.msra.mxu0 %v671
    %1167 = vmatmul.bf16.gmra.mxu0 %v53
    %v1168 = vpop.f32.mrf.mxu0
    %v1169 = vadd.f32 0.0, %v1168
    %v1170 = vpop.f32.mrf.mxu0
    %1171 = vdwg.mxu0
    %1172 = vmatpush.bf16.msra.mxu0 %v806
    %1173 = vmatpush.bf16.msra.mxu0 %v797
    %1174 = vmatpush.bf16.msra.mxu0 %v788
    %1175 = vmatpush.bf16.msra.mxu0 %v779
    %1176 = vmatpush.bf16.msra.mxu0 %v770
    %1177 = vmatpush.bf16.msra.mxu0 %v761
    %1178 = vmatpush.bf16.msra.mxu0 %v752
    %1179 = vmatpush.bf16.msra.mxu0 %v743
    %1180 = vmatmul.bf16.gmra.mxu0 %v54
    %v1181 = vpop.f32.mrf.mxu0
    %v1182 = vadd.f32 %v1169, %v1181
    %v1183 = vpop.f32.mrf.mxu0
    %1184 = vdwg.mxu0
    %1185 = vst [vmem:[#allocation7] sm:$0xff] %v974
    %v1186 = vld [vmem:[%s2] sm:$0xf]
    %v1187 = vld [vmem:[%s3] sm:$0xff]
    %v1188 = vadd.f32 %v1000, %v1026
    %v1189 = vadd.f32 %v1188, %v1052
    %v1190 = vadd.f32 %v1189, %v1078
    %v1191 = vadd.f32 %v1190, %v1104
    %v1192 = vadd.f32 %v1191, %v1130
    %v1193 = vadd.f32 %v1192, %v1156
    %v1194 = vadd.f32 %v1193, %v1182
    %1195 = vadd.xlane.f32.xlu0 %v1194
    %v1196 = vpop.xlane.xlu0 %1195
    %vm1197 = vcmask 64512
    %v1199 = vsel %vm1197, %v1186, 0
    %1201 = vmatpush.msra.mxu0 0.0
    %1202 = vmatpush.msra.mxu0 0.0
    %1203 = vmatpush.msra.mxu0 0.0
    %1204 = vmatpush.msra.mxu0 0.0
    %1205 = vmatpush.msra.mxu0 0.0
    %1206 = vmatpush.msra.mxu0 0.0
    %1207 = vmatpush.msra.mxu0 0.0
    %1208 = vmatpush.msra.mxu0 0.0
    %1209 = vmatpush.msra.mxu0 0.0
    %1210 = vmatpush.msra.mxu0 0.0
    %1211 = vmatpush.msra.mxu0 0.0
    %1212 = vmatpush.msra.mxu0 0.0
    %1213 = vmatpush.msra.mxu0 0.0
    %1214 = vmatpush.msra.mxu0 0.0
    %1215 = vmatpush.msra.mxu0 0.0
    %1216 = vmatpush.msra.mxu0 %v1196
    %1217 = vmatmul.f32.gmra.mxu0 %v1199
    %v1218 = vpop.f32.mrf.mxu0
    %v1219 = vadd.f32 0.0, %v1218
    %1220 = vdwg.mxu0
    %vm1221 = vcmask 31744
    %v1223 = vsel %vm1221, %v1187, 0
    %vm1225 = vcmask 1043456
    %v1227 = vsel %vm1225, %v1219, 0
    %1229 = vmatpush.msra.mxu0 0.0
    %1230 = vmatpush.msra.mxu0 0.0
    %1231 = vmatpush.msra.mxu0 0.0
    %1232 = vmatpush.msra.mxu0 0.0
    %1233 = vmatpush.msra.mxu0 0.0
    %1234 = vmatpush.msra.mxu0 0.0
    %1235 = vmatpush.msra.mxu0 0.0
    %1236 = vmatpush.msra.mxu0 0.0
    %1237 = vmatpush.msra.mxu0 0.0
    %1238 = vmatpush.msra.mxu0 0.0
    %1239 = vmatpush.msra.mxu0 0.0
    %1240 = vmatpush.msra.mxu0 0.0
    %1241 = vmatpush.msra.mxu0 0.0
    %1242 = vmatpush.msra.mxu0 0.0
    %1243 = vmatpush.msra.mxu0 0.0
    %1244 = vmatpush.msra.mxu0 %v1227
    %1245 = vmatmul.f32.gmra.mxu0 %v1223
    %v1246 = vpop.f32.mrf.mxu0
    %v1247 = vadd.f32 0.0, %v1246
    %1248 = vdwg.mxu0
    %1250 = vset.pattern.permute.xlu0 0
    %1251 = vperm.xlu0 %1250, %v1247
    %v1252 = vpop.permute.xlu0 %1251
    %v1254 = vsub.f32 %v1000, %v1252
    %v1255 = vsub.f32 %v1026, %v1252
    %v1256 = vsub.f32 %v1052, %v1252
    %v1257 = vsub.f32 %v1078, %v1252
    %v1258 = vsub.f32 %v1104, %v1252
    %v1259 = vsub.f32 %v1130, %v1252
    %v1260 = vsub.f32 %v1156, %v1252
    %v1261 = vsub.f32 %v1182, %v1252
    %v1262 = vmul.f32 %v1254, %v1254
    %v1263 = vmul.f32 %v1255, %v1255
    %v1264 = vmul.f32 %v1256, %v1256
    %v1265 = vmul.f32 %v1257, %v1257
    %v1266 = vmul.f32 %v1258, %v1258
    %v1267 = vmul.f32 %v1259, %v1259
    %v1268 = vmul.f32 %v1260, %v1260
    %v1269 = vmul.f32 %v1261, %v1261
    %v1270 = vadd.f32 %v1262, %v1263
    %v1271 = vadd.f32 %v1270, %v1264
    %v1272 = vadd.f32 %v1271, %v1265
    %v1273 = vadd.f32 %v1272, %v1266
    %v1274 = vadd.f32 %v1273, %v1267
    %v1275 = vadd.f32 %v1274, %v1268
    %v1276 = vadd.f32 %v1275, %v1269
    %1277 = vadd.xlane.f32.xlu0 %v1276
    %v1278 = vpop.xlane.xlu0 %1277
    %1279 = vmatpush.msra.mxu0 0.0
    %1280 = vmatpush.msra.mxu0 0.0
    %1281 = vmatpush.msra.mxu0 0.0
    %1282 = vmatpush.msra.mxu0 0.0
    %1283 = vmatpush.msra.mxu0 0.0
    %1284 = vmatpush.msra.mxu0 0.0
    %1285 = vmatpush.msra.mxu0 0.0
    %1286 = vmatpush.msra.mxu0 0.0
    %1287 = vmatpush.msra.mxu0 0.0
    %1288 = vmatpush.msra.mxu0 0.0
    %1289 = vmatpush.msra.mxu0 0.0
    %1290 = vmatpush.msra.mxu0 0.0
    %1291 = vmatpush.msra.mxu0 0.0
    %1292 = vmatpush.msra.mxu0 0.0
    %1293 = vmatpush.msra.mxu0 0.0
    %1294 = vmatpush.msra.mxu0 %v1278
    %1295 = vmatmul.f32.gmra.mxu0 %v1199
    %v1296 = vpop.f32.mrf.mxu0
    %v1297 = vadd.f32 0.0, %v1296
    %1298 = vdwg.mxu0
    %v1300 = vsel %vm1225, %v1297, 0
    %1302 = vmatpush.msra.mxu0 0.0
    %1303 = vmatpush.msra.mxu0 0.0
    %1304 = vmatpush.msra.mxu0 0.0
    %1305 = vmatpush.msra.mxu0 0.0
    %1306 = vmatpush.msra.mxu0 0.0
    %1307 = vmatpush.msra.mxu0 0.0
    %1308 = vmatpush.msra.mxu0 0.0
    %1309 = vmatpush.msra.mxu0 0.0
    %1310 = vmatpush.msra.mxu0 0.0
    %1311 = vmatpush.msra.mxu0 0.0
    %1312 = vmatpush.msra.mxu0 0.0
    %1313 = vmatpush.msra.mxu0 0.0
    %1314 = vmatpush.msra.mxu0 0.0
    %1315 = vmatpush.msra.mxu0 0.0
    %1316 = vmatpush.msra.mxu0 0.0
    %1317 = vmatpush.msra.mxu0 %v1300
    %1318 = vmatmul.f32.gmra.mxu0 %v1223
    %v1319 = vpop.f32.mrf.mxu0
    %v1320 = vadd.f32 0.0, %v1319
    %1321 = vdwg.mxu0
    %v1322 = vrsqrt.pop %v1320
    %v1323 = vmul.f32 %v1322, %v1320
    %v1324 = vmul.f32 %v1323, %v1322
    %v1325 = vmul.f32 0.5, %v1324
    %v1326 = vsub.f32 1.5, %v1325
    %v1327 = vmul.f32 %v1322, %v1326
    %vm1328 = vweird.f32 %v1320
    %vm1329 = vweird.f32 %v1322
    %vm1330 = vmor %vm1328, %vm1329
    %v1331 = vsel %vm1330, %v1322, %v1327
    %1333 = vset.pattern.permute.xlu0 0
    %1334 = vperm.xlu0 %1333, %v1331
    %v1335 = vpop.permute.xlu0 %1334
    %v1337 = vmul.f32 %v1254, %v1335
    %v1338 = vmul.f32 %v1255, %v1335
    %v1339 = vmul.f32 %v1256, %v1335
    %v1340 = vmul.f32 %v1257, %v1335
    %v1341 = vmul.f32 %v1258, %v1335
    %v1342 = vmul.f32 %v1259, %v1335
    %v1343 = vmul.f32 %v1260, %v1335
    %v1344 = vmul.f32 %v1261, %v1335
    %1345 = vst [vmem:[#allocation8] sm:$0xff] %v1337
    %1346 = vst [vmem:[#allocation8 + $0x8] sm:$0xff] %v1338
    %1347 = vst [vmem:[#allocation8 + $0x10] sm:$0xff] %v1339
    %1348 = vst [vmem:[#allocation8 + $0x18] sm:$0xff] %v1340
    %1349 = vst [vmem:[#allocation8 + $0x20] sm:$0xff] %v1341
    %1350 = vst [vmem:[#allocation8 + $0x28] sm:$0xff] %v1342
    %1351 = vst [vmem:[#allocation8 + $0x30] sm:$0xff] %v1343
    %1352 = vst [vmem:[#allocation8 + $0x38] sm:$0xff] %v1344
    // Predicated region
    $region26: #{tpu_custom_call.1} parent=1 // pred_check
      _
    $region27: #{tpu_custom_call.1} parent=1 // pred_check_branch
      %1354 = sbr.rel (0) target = $region29
    $region28: #{tpu_custom_call.1} parent=1 // pred_region
      %1356 = vsyncadd [#allocation4], 0
      %s1358 = sshll.u32 [#allocation7], 4
      %s1359 = int_to_ptr.vmem [resolvable:$true] %s1358
      %s1360 = sshll.u32 %s4, 4
      %s1361 = int_to_ptr.hbm [resolvable:$true] %s1360
      %1363 = dma.vmem_to_hbm [thread:$0]  %s1359, 128, %s1361, [#allocation4]
    $region29: #{tpu_custom_call.1} parent=1 // pred_fallthru
      _
    // Predicated region
    $region30: #{tpu_custom_call.1} parent=1 // pred_check
      _
    $region31: #{tpu_custom_call.1} parent=1 // pred_check_branch
      %1365 = sbr.rel (0) target = $region33
    $region32: #{tpu_custom_call.1} parent=1 // pred_region
      %1367 = vsyncadd [#allocation9], 0
      %s1369 = sshll.u32 [#allocation8], 4
      %s1370 = int_to_ptr.vmem [resolvable:$true] %s1369
      %s1371 = sshll.u32 %s5, 4
      %s1372 = int_to_ptr.hbm [resolvable:$true] %s1371
      %1374 = dma.vmem_to_hbm [thread:$0]  %s1370, 1024, %s1372, [#allocation9]
    $region33: #{tpu_custom_call.1} parent=1 // pred_fallthru
      _
    // Predicated region
    $region34: #{tpu_custom_call.1} parent=1 // pred_check
      _
    $region35: #{tpu_custom_call.1} parent=1 // pred_check_branch
      %1376 = sbr.rel (0) target = $region37
    $region36: #{tpu_custom_call.1} parent=1 // pred_region
      %1378 = dma.done [#allocation4], 128
    $region37: #{tpu_custom_call.1} parent=1 // pred_fallthru
      _
    // Predicated region
    $region38: #{tpu_custom_call.1} parent=1 // pred_check
      _
    $region39: #{tpu_custom_call.1} parent=1 // pred_check_branch
      %1380 = sbr.rel (0) target = $region41
    $region40: #{tpu_custom_call.1} parent=1 // pred_region
      %1382 = dma.done [#allocation9], 1024
    $region41: #{tpu_custom_call.1} parent=1 // pred_fallthru
      _
    %1383 = vsyncpa [#allocation3], 1
    %1384 = vsyncpa [#allocation6], 1
    %1385 = vsyncpa [#allocation4], 1
    %1386 = vsyncpa [#allocation9], 1

</llo_original>
